<compile_context>
chip_gen: v7x
topology: tpu7x:2x2x1
jax: 0.10.0
libtpu: 0.0.40
codegen_flags: <defaults>
</compile_context>

<pallas_src>
import math

import jax
import jax.numpy as jnp
from jax import lax
from jax.experimental import pallas as pl
from jax.experimental.pallas import tpu as pltpu

LANE = 128


def _round_up(x: int, m: int) -> int:
    return ((x + m - 1) // m) * m


def _largest_divisor_leq(n: int, cap: int) -> int:
    cap = max(1, min(n, cap))
    for d in range(cap, 0, -1):
        if n % d == 0:
            return d
    return 1


def _choose_tiles(T: int, R: int, in_itemsize: int, out_itemsize: int):
    """Pick (TB, TR): small, dtype-aligned feature tiles; ~4 MiB time blocks."""
    # Sublane-packing alignment: f32 -> 8 rows, bf16 -> 16, int8/fp8 -> 32.
    sub = 32 if in_itemsize == 1 else (16 if in_itemsize == 2 else 8)
    TR_CAP = 128  # <= 16 f32 vregs of membrane carry -> stays in registers.

    if R <= sub:
        TR = R  # full-dim block (allowed even if not a multiple of 8)
    else:
        # Balanced tiling with bounded padding; prefer >=2 feature tiles so the
        # "parallel" axis can split across both v7x TensorCores.
        num_r_min = 2 if R >= 2 * sub else 1
        num_r = max(pl.cdiv(R, TR_CAP), num_r_min)
        TR = _round_up(pl.cdiv(R, num_r), sub)
        if TR >= R:
            TR = R

    # Time block: ~4 MiB input blocks (amortise ~0.35us/grid-step overhead)
    # while keeping 2x(in)+2x(out) double buffers well under 32 MiB VMEM.
    per_t_bytes = TR * LANE * max(in_itemsize, out_itemsize)
    target_block_bytes = 4 * 1024 * 1024
    tb_cap = max(1, min(T, target_block_bytes // max(per_t_bytes, 1), 256))
    # Prefer a divisor of T (no wasted tail work); fall back to a masked tail.
    tb_div = _largest_divisor_leq(T, tb_cap)
    TB = tb_div if (tb_div * 2 > tb_cap or tb_div == T) else tb_cap
    return TB, TR


def _lif_kernel_factory(tau: float, v_th: float, tb: int, unroll: int):
    def lif_kernel(x_ref, out_ref, mem_ref):
        # mem_ref persists across grid iterations of the (innermost) time axis.
        # Select the zero init at the first time block of every feature tile
        # (no extra store + reload of the scratch).
        is_first = pl.program_id(1) == 0
        mem_init = jnp.where(is_first, 0.0, mem_ref[...])

        def step(i, mem):
            x_t = x_ref[i].astype(jnp.float32)           # (TR, 128) in-vreg cast
            mem = tau * mem + x_t                         # leaky integrate (f32)
            spike = mem > v_th                            # ZIF forward (strict >)
            out_ref[i] = spike.astype(out_ref.dtype)      # store at storage dtype
            return jnp.where(spike, 0.0, mem)             # fused hard reset

        mem_ref[...] = lax.fori_loop(0, tb, step, mem_init, unroll=unroll)

    return lif_kernel


def lif_legacy_forward(x, thresh: float = 1.0, tau: float = 0.25, gamma: float = 1.0,
                       spike_dtype=None):
    """x: [T, ...] float array. Returns spikes of the same shape.

    spike_dtype (optional): narrower output dtype (e.g. jnp.int8) to save write
    bandwidth; defaults to x.dtype to match the PyTorch module exactly.
    """
    # NOTE: gamma only affects the ZIF surrogate gradient (backward pass), not
    # the forward heaviside, so it is unused here.
    del gamma
    orig_shape = x.shape
    in_dtype = jnp.dtype(x.dtype)
    out_dtype = jnp.dtype(spike_dtype) if spike_dtype is not None else in_dtype
    T = orig_shape[0]
    N = math.prod(orig_shape[1:]) if len(orig_shape) > 1 else 1
    in_itemsize = in_dtype.itemsize
    out_itemsize = out_dtype.itemsize

    R = pl.cdiv(N, LANE)
    N_lane = R * LANE
    TB, TR = _choose_tiles(T, R, in_itemsize, out_itemsize)
    num_r = pl.cdiv(R, TR)
    num_t = pl.cdiv(T, TB)

    x_flat = x.reshape(T, N)
    if N_lane != N:
        # Unavoidable minimal lane pad (< 128 columns) when N % 128 != 0.
        x_flat = jnp.pad(x_flat, ((0, 0), (0, N_lane - N)))
    x_tiled = x_flat.reshape(T, R, LANE)
    # Time / feature-row tails are handled by Pallas boundary-block masking:
    # no wrapper-side padding or un-padding passes.

    kernel = _lif_kernel_factory(float(tau), float(thresh), TB,
                                 unroll=max(1, min(TB, 8)))

    cost = pl.CostEstimate(
        flops=5 * T * R * LANE,
        transcendentals=0,
        bytes_accessed=T * R * LANE * (in_itemsize + out_itemsize),
    )

    out_tiled = pl.pallas_call(
        kernel,
        out_shape=jax.ShapeDtypeStruct((T, R, LANE), out_dtype),
        grid_spec=pltpu.PrefetchScalarGridSpec(
            num_scalar_prefetch=0,
            grid=(num_r, num_t),
            in_specs=[pl.BlockSpec((TB, TR, LANE), lambda r, t: (t, r, 0))],
            out_specs=pl.BlockSpec((TB, TR, LANE), lambda r, t: (t, r, 0)),
            scratch_shapes=[pltpu.VMEM((TR, LANE), jnp.float32)],
        ),
        compiler_params=pltpu.CompilerParams(
            # Feature axis independent (megacore-shardable on v7x);
            # time axis carries the membrane recurrence -> sequential.
            dimension_semantics=("parallel", "arbitrary"),
            # Explicit 32 MiB: above v5e's 16 MiB scoped default, safe on
            # v7x's 64 MiB physical VMEM with double-buffered ~4 MiB blocks.
            vmem_limit_bytes=32 * 1024 * 1024,
        ),
        cost_estimate=cost,
    )(x_tiled)

    out = out_tiled.reshape(T, N_lane)
    if N_lane != N:
        out = out[:, :N]
    return out.reshape(orig_shape)


def _lif_reference(x, thresh=1.0, tau=0.25):
    """Pure-JAX reference mirroring the PyTorch loop."""
    xf = x.astype(jnp.float32)
    mem = jnp.zeros_like(xf[0])
    outs = []
    for t in range(xf.shape[0]):
        mem = tau * mem + xf[t]
        spike = (mem - thresh > 0.0).astype(jnp.float32)
        mem = mem * (1.0 - spike)
        outs.append(spike)
    return jnp.stack(outs).astype(x.dtype)


if __name__ == "__main__":
    key = jax.random.PRNGKey(0)
    T, B, C, H, W = 8, 2, 4, 16, 16
    # Scale so some membrane potentials cross the threshold of 1.0.
    x = jax.random.normal(key, (T, B, C, H, W), dtype=jnp.float32) * 1.5

    out = lif_legacy_forward(x, thresh=1.0, tau=0.25, gamma=1.0)
    out = jax.block_until_ready(out)

    ref = _lif_reference(x, thresh=1.0, tau=0.25)
    assert out.shape == x.shape
    assert out.dtype == x.dtype
    assert jnp.allclose(out.astype(jnp.float32), ref.astype(jnp.float32)), (
        "Pallas LIF output mismatch vs reference"
    )

    # Also exercise a bf16 / ragged path (native-dtype I/O, N not a multiple of
    # 128, T not "nice") to check the boundary-masked tiles.
    x2 = (jax.random.normal(jax.random.PRNGKey(1), (5, 3, 7, 11), dtype=jnp.float32)
          * 1.5).astype(jnp.bfloat16)
    out2 = jax.block_until_ready(lif_legacy_forward(x2))
    ref2 = _lif_reference(x2)
    assert out2.shape == x2.shape and out2.dtype == x2.dtype
    assert jnp.allclose(out2.astype(jnp.float32), ref2.astype(jnp.float32)), (
        "Pallas LIF bf16 output mismatch vs reference"
    )

    print("KERNEL_OK")
</pallas_src>

<mosaic_0001>
module attributes {stable_mosaic.version = 11 : i64} {
  func.func @lif_kernel(%arg0: i32, %arg1: i32, %arg2: memref<8x8x128xf32, #tpu.memory_space<vmem>>, %arg3: memref<8x8x128xf32, #tpu.memory_space<vmem>>, %arg4: memref<8x128xf32, #tpu.memory_space<vmem>>) attributes {dimension_semantics = [#tpu.dimension_semantics<parallel>, #tpu.dimension_semantics<arbitrary>], iteration_bounds = array<i64: 2, 1>, scalar_prefetch = 0 : i64, scratch_operands = 1 : i64, tpu.core_type = #tpu.core_type<tc>, window_params = [{transform_indices = @transform_0, window_bounds = array<i64: 8, 8, 128>}, {transform_indices = @transform_1, window_bounds = array<i64: 8, 8, 128>}]} {
    %c0_i32 = arith.constant 0 : i32
    %0 = arith.cmpi eq, %arg1, %c0_i32 : i32
    %c0 = arith.constant 0 : index
    %c0_0 = arith.constant 0 : index
    %1 = vector.load %arg4[%c0, %c0_0] : memref<8x128xf32, #tpu.memory_space<vmem>>, vector<8x128xf32>
    %cst = arith.constant 0.000000e+00 : f32
    %2 = vector.broadcast %cst : f32 to vector<8x128xf32>
    %3 = arith.select %0, %2, %1 : vector<8x128xf32>
    %c0_i32_1 = arith.constant 0 : i32
    %4 = arith.index_cast %c0_i32_1 : i32 to index
    %c0_2 = arith.constant 0 : index
    %c0_3 = arith.constant 0 : index
    %5 = vector.load %arg2[%4, %c0_2, %c0_3] : memref<8x8x128xf32, #tpu.memory_space<vmem>>, vector<1x8x128xf32>
    %6 = vector.shape_cast %5 : vector<1x8x128xf32> to vector<8x128xf32>
    %cst_4 = arith.constant 2.500000e-01 : f32
    %7 = vector.broadcast %cst_4 : f32 to vector<8x128xf32>
    %8 = arith.mulf %7, %3 : vector<8x128xf32>
    %9 = arith.addf %8, %6 : vector<8x128xf32>
    %cst_5 = arith.constant 1.000000e+00 : f32
    %10 = vector.broadcast %cst_5 : f32 to vector<8x128xf32>
    %11 = arith.cmpf ogt, %9, %10 : vector<8x128xf32>
    %12 = arith.extui %11 : vector<8x128xi1> to vector<8x128xi32>
    %13 = arith.sitofp %12 : vector<8x128xi32> to vector<8x128xf32>
    %14 = arith.index_cast %c0_i32_1 : i32 to index
    %c0_6 = arith.constant 0 : index
    %c0_7 = arith.constant 0 : index
    %15 = vector.load %arg3[%14, %c0_6, %c0_7] : memref<8x8x128xf32, #tpu.memory_space<vmem>>, vector<1x8x128xf32>
    %16 = vector.shape_cast %15 : vector<1x8x128xf32> to vector<8x128xf32>
    %17 = vector.shape_cast %13 : vector<8x128xf32> to vector<1x8x128xf32>
    tpu.vector_store %arg3[%14, %c0_6, %c0_7], %17 {strides = array<i32>} : memref<8x8x128xf32, #tpu.memory_space<vmem>>, vector<1x8x128xf32>,
    %cst_8 = arith.constant 0.000000e+00 : f32
    %18 = vector.broadcast %cst_8 : f32 to vector<8x128xf32>
    %19 = arith.select %11, %18, %9 : vector<8x128xi1>, vector<8x128xf32>
    %c1_i32 = arith.constant 1 : i32
    %20 = arith.index_cast %c1_i32 : i32 to index
    %c0_9 = arith.constant 0 : index
    %c0_10 = arith.constant 0 : index
    %21 = vector.load %arg2[%20, %c0_9, %c0_10] : memref<8x8x128xf32, #tpu.memory_space<vmem>>, vector<1x8x128xf32>
    %22 = vector.shape_cast %21 : vector<1x8x128xf32> to vector<8x128xf32>
    %cst_11 = arith.constant 2.500000e-01 : f32
    %23 = vector.broadcast %cst_11 : f32 to vector<8x128xf32>
    %24 = arith.mulf %23, %19 : vector<8x128xf32>
    %25 = arith.addf %24, %22 : vector<8x128xf32>
    %cst_12 = arith.constant 1.000000e+00 : f32
    %26 = vector.broadcast %cst_12 : f32 to vector<8x128xf32>
    %27 = arith.cmpf ogt, %25, %26 : vector<8x128xf32>
    %28 = arith.extui %27 : vector<8x128xi1> to vector<8x128xi32>
    %29 = arith.sitofp %28 : vector<8x128xi32> to vector<8x128xf32>
    %30 = arith.index_cast %c1_i32 : i32 to index
    %c0_13 = arith.constant 0 : index
    %c0_14 = arith.constant 0 : index
    %31 = vector.load %arg3[%30, %c0_13, %c0_14] : memref<8x8x128xf32, #tpu.memory_space<vmem>>, vector<1x8x128xf32>
    %32 = vector.shape_cast %31 : vector<1x8x128xf32> to vector<8x128xf32>
    %33 = vector.shape_cast %29 : vector<8x128xf32> to vector<1x8x128xf32>
    tpu.vector_store %arg3[%30, %c0_13, %c0_14], %33 {strides = array<i32>} : memref<8x8x128xf32, #tpu.memory_space<vmem>>, vector<1x8x128xf32>,
    %cst_15 = arith.constant 0.000000e+00 : f32
    %34 = vector.broadcast %cst_15 : f32 to vector<8x128xf32>
    %35 = arith.select %27, %34, %25 : vector<8x128xi1>, vector<8x128xf32>
    %c2_i32 = arith.constant 2 : i32
    %36 = arith.index_cast %c2_i32 : i32 to index
    %c0_16 = arith.constant 0 : index
    %c0_17 = arith.constant 0 : index
    %37 = vector.load %arg2[%36, %c0_16, %c0_17] : memref<8x8x128xf32, #tpu.memory_space<vmem>>, vector<1x8x128xf32>
    %38 = vector.shape_cast %37 : vector<1x8x128xf32> to vector<8x128xf32>
    %cst_18 = arith.constant 2.500000e-01 : f32
    %39 = vector.broadcast %cst_18 : f32 to vector<8x128xf32>
    %40 = arith.mulf %39, %35 : vector<8x128xf32>
    %41 = arith.addf %40, %38 : vector<8x128xf32>
    %cst_19 = arith.constant 1.000000e+00 : f32
    %42 = vector.broadcast %cst_19 : f32 to vector<8x128xf32>
    %43 = arith.cmpf ogt, %41, %42 : vector<8x128xf32>
    %44 = arith.extui %43 : vector<8x128xi1> to vector<8x128xi32>
    %45 = arith.sitofp %44 : vector<8x128xi32> to vector<8x128xf32>
    %46 = arith.index_cast %c2_i32 : i32 to index
    %c0_20 = arith.constant 0 : index
    %c0_21 = arith.constant 0 : index
    %47 = vector.load %arg3[%46, %c0_20, %c0_21] : memref<8x8x128xf32, #tpu.memory_space<vmem>>, vector<1x8x128xf32>
    %48 = vector.shape_cast %47 : vector<1x8x128xf32> to vector<8x128xf32>
    %49 = vector.shape_cast %45 : vector<8x128xf32> to vector<1x8x128xf32>
    tpu.vector_store %arg3[%46, %c0_20, %c0_21], %49 {strides = array<i32>} : memref<8x8x128xf32, #tpu.memory_space<vmem>>, vector<1x8x128xf32>,
    %cst_22 = arith.constant 0.000000e+00 : f32
    %50 = vector.broadcast %cst_22 : f32 to vector<8x128xf32>
    %51 = arith.select %43, %50, %41 : vector<8x128xi1>, vector<8x128xf32>
    %c3_i32 = arith.constant 3 : i32
    %52 = arith.index_cast %c3_i32 : i32 to index
    %c0_23 = arith.constant 0 : index
    %c0_24 = arith.constant 0 : index
    %53 = vector.load %arg2[%52, %c0_23, %c0_24] : memref<8x8x128xf32, #tpu.memory_space<vmem>>, vector<1x8x128xf32>
    %54 = vector.shape_cast %53 : vector<1x8x128xf32> to vector<8x128xf32>
    %cst_25 = arith.constant 2.500000e-01 : f32
    %55 = vector.broadcast %cst_25 : f32 to vector<8x128xf32>
    %56 = arith.mulf %55, %51 : vector<8x128xf32>
    %57 = arith.addf %56, %54 : vector<8x128xf32>
    %cst_26 = arith.constant 1.000000e+00 : f32
    %58 = vector.broadcast %cst_26 : f32 to vector<8x128xf32>
    %59 = arith.cmpf ogt, %57, %58 : vector<8x128xf32>
    %60 = arith.extui %59 : vector<8x128xi1> to vector<8x128xi32>
    %61 = arith.sitofp %60 : vector<8x128xi32> to vector<8x128xf32>
    %62 = arith.index_cast %c3_i32 : i32 to index
    %c0_27 = arith.constant 0 : index
    %c0_28 = arith.constant 0 : index
    %63 = vector.load %arg3[%62, %c0_27, %c0_28] : memref<8x8x128xf32, #tpu.memory_space<vmem>>, vector<1x8x128xf32>
    %64 = vector.shape_cast %63 : vector<1x8x128xf32> to vector<8x128xf32>
    %65 = vector.shape_cast %61 : vector<8x128xf32> to vector<1x8x128xf32>
    tpu.vector_store %arg3[%62, %c0_27, %c0_28], %65 {strides = array<i32>} : memref<8x8x128xf32, #tpu.memory_space<vmem>>, vector<1x8x128xf32>,
    %cst_29 = arith.constant 0.000000e+00 : f32
    %66 = vector.broadcast %cst_29 : f32 to vector<8x128xf32>
    %67 = arith.select %59, %66, %57 : vector<8x128xi1>, vector<8x128xf32>
    %c4_i32 = arith.constant 4 : i32
    %68 = arith.index_cast %c4_i32 : i32 to index
    %c0_30 = arith.constant 0 : index
    %c0_31 = arith.constant 0 : index
    %69 = vector.load %arg2[%68, %c0_30, %c0_31] : memref<8x8x128xf32, #tpu.memory_space<vmem>>, vector<1x8x128xf32>
    %70 = vector.shape_cast %69 : vector<1x8x128xf32> to vector<8x128xf32>
    %cst_32 = arith.constant 2.500000e-01 : f32
    %71 = vector.broadcast %cst_32 : f32 to vector<8x128xf32>
    %72 = arith.mulf %71, %67 : vector<8x128xf32>
    %73 = arith.addf %72, %70 : vector<8x128xf32>
    %cst_33 = arith.constant 1.000000e+00 : f32
    %74 = vector.broadcast %cst_33 : f32 to vector<8x128xf32>
    %75 = arith.cmpf ogt, %73, %74 : vector<8x128xf32>
    %76 = arith.extui %75 : vector<8x128xi1> to vector<8x128xi32>
    %77 = arith.sitofp %76 : vector<8x128xi32> to vector<8x128xf32>
    %78 = arith.index_cast %c4_i32 : i32 to index
    %c0_34 = arith.constant 0 : index
    %c0_35 = arith.constant 0 : index
    %79 = vector.load %arg3[%78, %c0_34, %c0_35] : memref<8x8x128xf32, #tpu.memory_space<vmem>>, vector<1x8x128xf32>
    %80 = vector.shape_cast %79 : vector<1x8x128xf32> to vector<8x128xf32>
    %81 = vector.shape_cast %77 : vector<8x128xf32> to vector<1x8x128xf32>
    tpu.vector_store %arg3[%78, %c0_34, %c0_35], %81 {strides = array<i32>} : memref<8x8x128xf32, #tpu.memory_space<vmem>>, vector<1x8x128xf32>,
    %cst_36 = arith.constant 0.000000e+00 : f32
    %82 = vector.broadcast %cst_36 : f32 to vector<8x128xf32>
    %83 = arith.select %75, %82, %73 : vector<8x128xi1>, vector<8x128xf32>
    %c5_i32 = arith.constant 5 : i32
    %84 = arith.index_cast %c5_i32 : i32 to index
    %c0_37 = arith.constant 0 : index
    %c0_38 = arith.constant 0 : index
    %85 = vector.load %arg2[%84, %c0_37, %c0_38] : memref<8x8x128xf32, #tpu.memory_space<vmem>>, vector<1x8x128xf32>
    %86 = vector.shape_cast %85 : vector<1x8x128xf32> to vector<8x128xf32>
    %cst_39 = arith.constant 2.500000e-01 : f32
    %87 = vector.broadcast %cst_39 : f32 to vector<8x128xf32>
    %88 = arith.mulf %87, %83 : vector<8x128xf32>
    %89 = arith.addf %88, %86 : vector<8x128xf32>
    %cst_40 = arith.constant 1.000000e+00 : f32
    %90 = vector.broadcast %cst_40 : f32 to vector<8x128xf32>
    %91 = arith.cmpf ogt, %89, %90 : vector<8x128xf32>
    %92 = arith.extui %91 : vector<8x128xi1> to vector<8x128xi32>
    %93 = arith.sitofp %92 : vector<8x128xi32> to vector<8x128xf32>
    %94 = arith.index_cast %c5_i32 : i32 to index
    %c0_41 = arith.constant 0 : index
    %c0_42 = arith.constant 0 : index
    %95 = vector.load %arg3[%94, %c0_41, %c0_42] : memref<8x8x128xf32, #tpu.memory_space<vmem>>, vector<1x8x128xf32>
    %96 = vector.shape_cast %95 : vector<1x8x128xf32> to vector<8x128xf32>
    %97 = vector.shape_cast %93 : vector<8x128xf32> to vector<1x8x128xf32>
    tpu.vector_store %arg3[%94, %c0_41, %c0_42], %97 {strides = array<i32>} : memref<8x8x128xf32, #tpu.memory_space<vmem>>, vector<1x8x128xf32>,
    %cst_43 = arith.constant 0.000000e+00 : f32
    %98 = vector.broadcast %cst_43 : f32 to vector<8x128xf32>
    %99 = arith.select %91, %98, %89 : vector<8x128xi1>, vector<8x128xf32>
    %c6_i32 = arith.constant 6 : i32
    %100 = arith.index_cast %c6_i32 : i32 to index
    %c0_44 = arith.constant 0 : index
    %c0_45 = arith.constant 0 : index
    %101 = vector.load %arg2[%100, %c0_44, %c0_45] : memref<8x8x128xf32, #tpu.memory_space<vmem>>, vector<1x8x128xf32>
    %102 = vector.shape_cast %101 : vector<1x8x128xf32> to vector<8x128xf32>
    %cst_46 = arith.constant 2.500000e-01 : f32
    %103 = vector.broadcast %cst_46 : f32 to vector<8x128xf32>
    %104 = arith.mulf %103, %99 : vector<8x128xf32>
    %105 = arith.addf %104, %102 : vector<8x128xf32>
    %cst_47 = arith.constant 1.000000e+00 : f32
    %106 = vector.broadcast %cst_47 : f32 to vector<8x128xf32>
    %107 = arith.cmpf ogt, %105, %106 : vector<8x128xf32>
    %108 = arith.extui %107 : vector<8x128xi1> to vector<8x128xi32>
    %109 = arith.sitofp %108 : vector<8x128xi32> to vector<8x128xf32>
    %110 = arith.index_cast %c6_i32 : i32 to index
    %c0_48 = arith.constant 0 : index
    %c0_49 = arith.constant 0 : index
    %111 = vector.load %arg3[%110, %c0_48, %c0_49] : memref<8x8x128xf32, #tpu.memory_space<vmem>>, vector<1x8x128xf32>
    %112 = vector.shape_cast %111 : vector<1x8x128xf32> to vector<8x128xf32>
    %113 = vector.shape_cast %109 : vector<8x128xf32> to vector<1x8x128xf32>
    tpu.vector_store %arg3[%110, %c0_48, %c0_49], %113 {strides = array<i32>} : memref<8x8x128xf32, #tpu.memory_space<vmem>>, vector<1x8x128xf32>,
    %cst_50 = arith.constant 0.000000e+00 : f32
    %114 = vector.broadcast %cst_50 : f32 to vector<8x128xf32>
    %115 = arith.select %107, %114, %105 : vector<8x128xi1>, vector<8x128xf32>
    %c7_i32 = arith.constant 7 : i32
    %116 = arith.index_cast %c7_i32 : i32 to index
    %c0_51 = arith.constant 0 : index
    %c0_52 = arith.constant 0 : index
    %117 = vector.load %arg2[%116, %c0_51, %c0_52] : memref<8x8x128xf32, #tpu.memory_space<vmem>>, vector<1x8x128xf32>
    %118 = vector.shape_cast %117 : vector<1x8x128xf32> to vector<8x128xf32>
    %cst_53 = arith.constant 2.500000e-01 : f32
    %119 = vector.broadcast %cst_53 : f32 to vector<8x128xf32>
    %120 = arith.mulf %119, %115 : vector<8x128xf32>
    %121 = arith.addf %120, %118 : vector<8x128xf32>
    %cst_54 = arith.constant 1.000000e+00 : f32
    %122 = vector.broadcast %cst_54 : f32 to vector<8x128xf32>
    %123 = arith.cmpf ogt, %121, %122 : vector<8x128xf32>
    %124 = arith.extui %123 : vector<8x128xi1> to vector<8x128xi32>
    %125 = arith.sitofp %124 : vector<8x128xi32> to vector<8x128xf32>
    %126 = arith.index_cast %c7_i32 : i32 to index
    %c0_55 = arith.constant 0 : index
    %c0_56 = arith.constant 0 : index
    %127 = vector.load %arg3[%126, %c0_55, %c0_56] : memref<8x8x128xf32, #tpu.memory_space<vmem>>, vector<1x8x128xf32>
    %128 = vector.shape_cast %127 : vector<1x8x128xf32> to vector<8x128xf32>
    %129 = vector.shape_cast %125 : vector<8x128xf32> to vector<1x8x128xf32>
    tpu.vector_store %arg3[%126, %c0_55, %c0_56], %129 {strides = array<i32>} : memref<8x8x128xf32, #tpu.memory_space<vmem>>, vector<1x8x128xf32>,
    %cst_57 = arith.constant 0.000000e+00 : f32
    %130 = vector.broadcast %cst_57 : f32 to vector<8x128xf32>
    %131 = arith.select %123, %130, %121 : vector<8x128xi1>, vector<8x128xf32>
    %c8_i32 = arith.constant 8 : i32
    %c0_58 = arith.constant 0 : index
    %c0_59 = arith.constant 0 : index
    %132 = vector.load %arg4[%c0_58, %c0_59] : memref<8x128xf32, #tpu.memory_space<vmem>>, vector<8x128xf32>
    tpu.vector_store %arg4[%c0_58, %c0_59], %131 {strides = array<i32>} : memref<8x128xf32, #tpu.memory_space<vmem>>, vector<8x128xf32>,
    return
  }
  func.func @transform_0(%arg0: i32, %arg1: i32) -> (i32, i32, i32) {
    %c0_i32 = arith.constant 0 : i32
    %c0_i32_0 = arith.constant 0 : i32
    return %arg1, %arg0, %c0_i32 : i32, i32, i32
  }
  func.func @transform_1(%arg0: i32, %arg1: i32) -> (i32, i32, i32) {
    %c0_i32 = arith.constant 0 : i32
    %c0_i32_0 = arith.constant 0 : i32
    return %arg1, %arg0, %c0_i32 : i32, i32, i32
  }
}

</mosaic_0001>

<llo_original>
// kernel: tpu_custom_call.1
$region0: #{tpu_custom_call.1}
  #allocation0 [shape = 'u32[]', space=smem, size = 0x4, offset = 0x4, fixed_abs, tag = 'smem constant byte address 0x4 - core index']
  #allocation1 [shape = 'u32[144,128]{1,0:T(1,128)}', space=vmem, size = 0x12000, scoped, tag = 'internal scratch']
  #allocation2 [shape = 'f32[8,128]{1,0:T(8,128)}', space=vmem, size = 0x1000, scoped, tag = 'scratch operand']
  %s0 = inlined_call_operand.hbm [shape: f32[8,16,128], index: 0, kind: input, shape index: {}]
  %s1 = inlined_call_operand.hbm [shape: f32[8,16,128], index: 1, kind: output, shape index: {}]
  %s2 = sld [smem:[#allocation0]]
  $region41: #{tpu_custom_call.1} parent=0
    _
  %s4 = ssub.s32 1, %s2
  %s5 = scalar_select 0, %s4, %s2
  $region1: #{tpu_custom_call.1} parent=0
    #allocation3 [shape = 'u8[65536]{0}', space=vmem, size = 0x10000, scoped, tag = 'input window, operand 0']
    #allocation4 [shape = 's32[2]{0}', space=sflag, size = 0x8, scoped, tag = 'scoped memory for tpu_custom_call.1']
    #allocation5 [shape = 's32[2]{0}', space=sflag, size = 0x8, scoped, tag = 'scoped memory for tpu_custom_call.1']
    #allocation6 [shape = 'u8[65536]{0}', space=vmem, size = 0x10000, scoped, tag = 'output window, operand 0']
    %6 = vsyncpa [#allocation4], 0
    %s7 = scalar_lea.sflag [#allocation4], 1
    %8 = vsyncpa %s7, 0
    %9 = vsyncpa [#allocation5], 0
    %s10 = scalar_lea.sflag [#allocation5], 1
    %11 = vsyncpa %s10, 0
    loop: start=0, step=1, limit=4
    $region2: #{tpu_custom_call.1} parent=1 // loop_pre_header
      _
    $region3: #{tpu_custom_call.1} parent=1 // loop_header
      %s13 = sphi 0, %s17
      %p14 = scmp.ge.s32.totalorder %s13, 4
      %s20 = sphi 0, %s32
      %s21 = sphi 0, %s28
      %s22 = sphi 0, %s20
      %s23 = sphi 0, %s21
      %s24 = sphi 0, %s22
      %s25 = sphi 0, %s23
      %s37 = sphi 0, %s39
      %s40 = sphi 0, %s37
      %s41 = sphi 0, %s40
      %s57 = sphi 0, %s41
      %s65 = sphi 0, %s67
      %s68 = sphi 0, %s65
      %s69 = sphi 0, %s68
      %s85 = sphi 0, %s69
    $region4: #{tpu_custom_call.1} parent=1 // loop_header_branch
      %16 = sbr.rel (%p14) target = $region8
    $region5: #{tpu_custom_call.1} parent=1 // loop_body
      %s18 = ssub.s32 %s13, 1
      %s19 = ssub.s32 %s13, 2
      %s26 = sadd.s32 1, %s21
      %p27 = scmp.ge.s32.totalorder %s26, 1
      %s28 = scalar_select %p27, 0, %s26
      %s29 = sadd.s32 1, %s20
      %s30 = scalar_select %p27, %s29, %s20
      %p31 = scmp.ge.s32.totalorder %s30, 2
      %s32 = scalar_select %p31, 0, %s30
      %s33 = ssub.s32 %s21, %s28
      %s34 = ssub.s32 %s20, %s32
      %s35 = sor.u32 %s33, %s34
      %p36 = scmp.eq.s32.totalorder %s35, 0
      %s38 = sadd.s32 %s37, 1
      %s39 = scalar_select %p36, %s37, %s38
      %p42 = pneg %p36
      %p43 = scmp.eq.s32.totalorder %s13, 1
      %p44 = por %p42, %p43
      %p45 = scmp.ne.s32.totalorder %s37, %s40
      %p46 = scmp.eq.s32.totalorder %s13, 0
      %p47 = por %p45, %p46
      %p48 = scmp.ne.s32.totalorder %s37, %s40
      %p49 = scmp.eq.s32.totalorder %s18, 1
      %p50 = por %p48, %p49
      %p51 = scmp.ne.s32.totalorder %s40, %s41
      %p52 = scmp.eq.s32.totalorder %s18, 0
      %p53 = por %p51, %p52
      %p54 = scmp.ne.s32.totalorder %s40, %s41
      %p55 = scmp.eq.s32.totalorder %s19, 1
      %p56 = por %p54, %p55
      %p58 = scmp.ne.s32.totalorder %s41, %s57
      %p59 = scmp.eq.s32.totalorder %s19, 0
      %p60 = por %p58, %p59
      %s61 = ssub.s32 %s21, %s28
      %s62 = ssub.s32 %s20, %s32
      %s63 = sor.u32 %s61, %s62
      %p64 = scmp.eq.s32.totalorder %s63, 0
      %s66 = sadd.s32 %s65, 1
      %s67 = scalar_select %p64, %s65, %s66
      %p70 = pneg %p64
      %p71 = scmp.eq.s32.totalorder %s13, 1
      %p72 = por %p70, %p71
      %p73 = scmp.ne.s32.totalorder %s65, %s68
      %p74 = scmp.eq.s32.totalorder %s13, 0
      %p75 = por %p73, %p74
      %p76 = scmp.ne.s32.totalorder %s65, %s68
      %p77 = scmp.eq.s32.totalorder %s18, 1
      %p78 = por %p76, %p77
      %p79 = scmp.ne.s32.totalorder %s68, %s69
      %p80 = scmp.eq.s32.totalorder %s18, 0
      %p81 = por %p79, %p80
      %p82 = scmp.ne.s32.totalorder %s68, %s69
      %p83 = scmp.eq.s32.totalorder %s19, 1
      %p84 = por %p82, %p83
      %p86 = scmp.ne.s32.totalorder %s69, %s85
      %p87 = scmp.eq.s32.totalorder %s19, 0
      %p88 = por %p86, %p87
      %p89 = scmp.le.s32.totalorder 1, %s13
      %p90 = scmp.lt.s32.totalorder %s13, 3
      %p91 = pnand %p89, %p90
      %p92 = pneg %p91
      // Predicated region
      $region9: #{tpu_custom_call.1} parent=5 // pred_check
        _
      $region10: #{tpu_custom_call.1} parent=5 // pred_check_branch
        %94 = sbr.rel (%p91) target = $region12
      $region11: #{tpu_custom_call.1} parent=5 // pred_region
        %s95 = ssub.s32 %s13, 1
      $region12: #{tpu_custom_call.1} parent=5 // pred_fallthru
        _
      %p96 = scmp.lt.s32.totalorder %s13, 2
      // Predicated region
      $region13: #{tpu_custom_call.1} parent=5 // pred_check
        %p97 = pneg %p96
      $region14: #{tpu_custom_call.1} parent=5 // pred_check_branch
        %99 = sbr.rel (%p97) target = $region16
      $region15: #{tpu_custom_call.1} parent=5 // pred_region
        // Predicated region
        $region17: #{tpu_custom_call.1} parent=15 // pred_check
          %p100 = pneg %p47
        $region18: #{tpu_custom_call.1} parent=15 // pred_check_branch
          %102 = sbr.rel (%p100) target = $region20
        $region19: #{tpu_custom_call.1} parent=15 // pred_region
          %s103 = sand.u32 %s37, 1
          %s104 = scalar_lea.sflag [#allocation4], %s103
          %s105 = sand.u32 %s37, 1
          %s106 = smul.addr %s105, 64
          %s107 = scalar_lea.vmem [#allocation3], %s106
          %s108 = smul.u32 8, %s21
          %s110 = ssub.s32 1024, 1024
          %111 = vsyncadd %s104, %s110
          %s112 = smul.addr %s108, 2
          %s113 = sadd.s32 %s20, %s112
          %s114 = smul.addr %s113, 128
          %s115 = scalar_lea.hbm %s0, %s114
          %s116 = sshll.u32 %s107, 4
          %s117 = int_to_ptr.vmem [resolvable:$true] %s116
          %122 = dma.hbm_to_vmem [thread:$0]  %s115, 1024, %s117, %s104, 256, 128, 8
        $region20: #{tpu_custom_call.1} parent=15 // pred_fallthru
          _
      $region16: #{tpu_custom_call.1} parent=5 // pred_fallthru
        _
      %p123 = scmp.le.s32.totalorder 1, %s13
      %p124 = scmp.lt.s32.totalorder %s13, 3
      %p125 = pnand %p123, %p124
      %p126 = pneg %p125
      // Predicated region
      $region21: #{tpu_custom_call.1} parent=5 // pred_check
        _
      $region22: #{tpu_custom_call.1} parent=5 // pred_check_branch
        %128 = sbr.rel (%p125) target = $region24
      $region23: #{tpu_custom_call.1} parent=5 // pred_region
        %s129 = ssub.s32 %s13, 1
        %s130 = sand.u32 %s40, 1
        %s131 = scalar_lea.sflag [#allocation4], %s130
        %s132 = sand.u32 %s40, 1
        %s133 = smul.addr %s132, 64
        %s134 = scalar_lea.vmem [#allocation3], %s133
        // Predicated region
        $region25: #{tpu_custom_call.1} parent=23 // pred_check
          %p135 = pneg %p53
        $region26: #{tpu_custom_call.1} parent=23 // pred_check_branch
          %137 = sbr.rel (%p135) target = $region28
        $region27: #{tpu_custom_call.1} parent=23 // pred_region
          %138 = dma.done %s131, 1024
        $region28: #{tpu_custom_call.1} parent=23 // pred_fallthru
          _
        %s139 = sand.u32 %s40, 1
        %s140 = scalar_lea.sflag [#allocation4], %s139
        %s141 = sand.u32 %s40, 1
        %s142 = smul.addr %s141, 64
        %s143 = scalar_lea.vmem [#allocation3], %s142
        %p144 = pneg %p53
        %p145 = pneg %p50
        %p146 = pneg %p81
        %p147 = pneg %p78
        %s148 = sand.u32 %s68, 1
        %s149 = scalar_lea.sflag [#allocation5], %s148
        %s150 = sand.u32 %s68, 1
        %s151 = smul.addr %s150, 64
        %s152 = scalar_lea.vmem [#allocation6], %s151
        %s153 = smul.u32 8, %s23
        %s154 = smul.u32 8, %s23
        %p155 = scmp.eq.s32.totalorder %s23, 0
        %v156 = vld [vmem:[#allocation2] sm:$0xff]
        %s157 = scalar_select %p155, 1, 0
        %v158 = vstv %s157
        %vm159 = vcmp.eq.s32.totalorder %v158, 1
        %v160 = vsel %vm159, 0.0, %v156
        %v161 = vld [vmem:[%s134] sm:$0xff]
        %v162 = vmul.f32 %v160, 0.25
        %v163 = vadd.f32 %v162, %v161
        %vm164 = vcmp.gt.f32.partialorder %v163, 1.0
        %v165 = vsel %vm164, 1, 0
        %v166 = vcvt.s32.f32 %v165
        %167 = vst [vmem:[%s152] sm:$0xff] %v166
        %v168 = vsel %vm164, 0.0, %v163
        %s169 = scalar_lea.vmem %s134, 8 [#allocation3]
        %v170 = vld [vmem:[%s169] sm:$0xff]
        %v171 = vmul.f32 %v168, 0.25
        %v172 = vadd.f32 %v171, %v170
        %vm173 = vcmp.gt.f32.partialorder %v172, 1.0
        %v174 = vsel %vm173, 1, 0
        %v175 = vcvt.s32.f32 %v174
        %s176 = scalar_lea.vmem %s152, 8 [#allocation6]
        %177 = vst [vmem:[%s176] sm:$0xff] %v175
        %v178 = vsel %vm173, 0.0, %v172
        %s179 = scalar_lea.vmem %s134, 16 [#allocation3]
        %v180 = vld [vmem:[%s179] sm:$0xff]
        %v181 = vmul.f32 %v178, 0.25
        %v182 = vadd.f32 %v181, %v180
        %vm183 = vcmp.gt.f32.partialorder %v182, 1.0
        %v184 = vsel %vm183, 1, 0
        %v185 = vcvt.s32.f32 %v184
        %s186 = scalar_lea.vmem %s152, 16 [#allocation6]
        %187 = vst [vmem:[%s186] sm:$0xff] %v185
        %v188 = vsel %vm183, 0.0, %v182
        %s189 = scalar_lea.vmem %s134, 24 [#allocation3]
        %v190 = vld [vmem:[%s189] sm:$0xff]
        %v191 = vmul.f32 %v188, 0.25
        %v192 = vadd.f32 %v191, %v190
        %vm193 = vcmp.gt.f32.partialorder %v192, 1.0
        %v194 = vsel %vm193, 1, 0
        %v195 = vcvt.s32.f32 %v194
        %s196 = scalar_lea.vmem %s152, 24 [#allocation6]
        %197 = vst [vmem:[%s196] sm:$0xff] %v195
        %v198 = vsel %vm193, 0.0, %v192
        %s199 = scalar_lea.vmem %s134, 32 [#allocation3]
        %v200 = vld [vmem:[%s199] sm:$0xff]
        %v201 = vmul.f32 %v198, 0.25
        %v202 = vadd.f32 %v201, %v200
        %vm203 = vcmp.gt.f32.partialorder %v202, 1.0
        %v204 = vsel %vm203, 1, 0
        %v205 = vcvt.s32.f32 %v204
        %s206 = scalar_lea.vmem %s152, 32 [#allocation6]
        %207 = vst [vmem:[%s206] sm:$0xff] %v205
        %v208 = vsel %vm203, 0.0, %v202
        %s209 = scalar_lea.vmem %s134, 40 [#allocation3]
        %v210 = vld [vmem:[%s209] sm:$0xff]
        %v211 = vmul.f32 %v208, 0.25
        %v212 = vadd.f32 %v211, %v210
        %vm213 = vcmp.gt.f32.partialorder %v212, 1.0
        %v214 = vsel %vm213, 1, 0
        %v215 = vcvt.s32.f32 %v214
        %s216 = scalar_lea.vmem %s152, 40 [#allocation6]
        %217 = vst [vmem:[%s216] sm:$0xff] %v215
        %v218 = vsel %vm213, 0.0, %v212
        %s219 = scalar_lea.vmem %s134, 48 [#allocation3]
        %v220 = vld [vmem:[%s219] sm:$0xff]
        %v221 = vmul.f32 %v218, 0.25
        %v222 = vadd.f32 %v221, %v220
        %vm223 = vcmp.gt.f32.partialorder %v222, 1.0
        %v224 = vsel %vm223, 1, 0
        %v225 = vcvt.s32.f32 %v224
        %s226 = scalar_lea.vmem %s152, 48 [#allocation6]
        %227 = vst [vmem:[%s226] sm:$0xff] %v225
        %v228 = vsel %vm223, 0.0, %v222
        %s229 = scalar_lea.vmem %s134, 56 [#allocation3]
        %v230 = vld [vmem:[%s229] sm:$0xff]
        %v231 = vmul.f32 %v228, 0.25
        %v232 = vadd.f32 %v231, %v230
        %vm233 = vcmp.gt.f32.partialorder %v232, 1.0
        %v234 = vsel %vm233, 1, 0
        %v235 = vcvt.s32.f32 %v234
        %s236 = scalar_lea.vmem %s152, 56 [#allocation6]
        %237 = vst [vmem:[%s236] sm:$0xff] %v235
        %v238 = vsel %vm233, 0.0, %v232
        %239 = vst [vmem:[#allocation2] sm:$0xff] %v238
        %s240 = sand.u32 %s68, 1
        %s241 = scalar_lea.sflag [#allocation5], %s240
        %s242 = sand.u32 %s68, 1
        %s243 = smul.addr %s242, 64
        %s244 = scalar_lea.vmem [#allocation6], %s243
        // Predicated region
        $region29: #{tpu_custom_call.1} parent=23 // pred_check
          %p245 = pneg %p78
        $region30: #{tpu_custom_call.1} parent=23 // pred_check_branch
          %247 = sbr.rel (%p245) target = $region32
        $region31: #{tpu_custom_call.1} parent=23 // pred_region
          %s248 = smul.u32 8, %s23
          %s250 = ssub.s32 1024, 1024
          %251 = vsyncadd %s241, %s250
          %s252 = smul.addr %s248, 2
          %s253 = sadd.s32 %s22, %s252
          %s254 = smul.addr %s253, 128
          %s255 = scalar_lea.hbm %s1, %s254
          %s256 = sshll.u32 %s244, 4
          %s257 = int_to_ptr.vmem [resolvable:$true] %s256
          %262 = dma.vmem_to_hbm [thread:$0]  %s257, 1024, %s255, %s241, 128, 256, 8
        $region32: #{tpu_custom_call.1} parent=23 // pred_fallthru
          _
      $region24: #{tpu_custom_call.1} parent=5 // pred_fallthru
        _
      %p263 = scmp.le.s32.totalorder 2, %s13
      // Predicated region
      $region33: #{tpu_custom_call.1} parent=5 // pred_check
        %p264 = pneg %p263
      $region34: #{tpu_custom_call.1} parent=5 // pred_check_branch
        %266 = sbr.rel (%p264) target = $region36
      $region35: #{tpu_custom_call.1} parent=5 // pred_region
        %s267 = ssub.s32 %s13, 2
        // Predicated region
        $region37: #{tpu_custom_call.1} parent=35 // pred_check
          %p268 = pneg %p84
        $region38: #{tpu_custom_call.1} parent=35 // pred_check_branch
          %270 = sbr.rel (%p268) target = $region40
        $region39: #{tpu_custom_call.1} parent=35 // pred_region
          %s271 = sand.u32 %s69, 1
          %s272 = scalar_lea.sflag [#allocation5], %s271
          %s273 = sand.u32 %s69, 1
          %s274 = smul.addr %s273, 64
          %s275 = scalar_lea.vmem [#allocation6], %s274
          %276 = dma.done %s272, 1024
        $region40: #{tpu_custom_call.1} parent=35 // pred_fallthru
          _
      $region36: #{tpu_custom_call.1} parent=5 // pred_fallthru
        _
    $region6: #{tpu_custom_call.1} parent=1 // loop_footer
      %s17 = sadd.s32 1, %s13
    $region7: #{tpu_custom_call.1} parent=1 // loop_footer_branch
      %12 = sbr.rel target = $region3
    $region8: #{tpu_custom_call.1} parent=1 // loop_exit
      _
    %277 = vsyncpa [#allocation4], 1
    %s278 = scalar_lea.sflag [#allocation4], 1
    %279 = vsyncpa %s278, 1
    %280 = vsyncpa [#allocation5], 1
    %s281 = scalar_lea.sflag [#allocation5], 1
    %282 = vsyncpa %s281, 1

</llo_original>
